<compile_context>
chip_gen: v7x
topology: tpu7x:2x2x1
jax: 0.10.0
libtpu: 0.0.40
codegen_flags: <defaults>
</compile_context>

<pallas_src>
import functools

import jax
import jax.numpy as jnp
from jax.experimental import pallas as pl
from jax.experimental.pallas import tpu as pltpu


def _qnet_kernel(x_ref,
                 w1_ref, b1_ref,
                 w2_ref, b2_ref,
                 w3_ref, b3_ref,
                 w4_ref, b4_ref,
                 w5_ref, b5_ref,
                 o_ref):
    def linear(h, w_ref, b_ref):
        # bf16 MXU inputs, f32 accumulation; bias added in f32.
        return (jnp.dot(h.astype(jnp.bfloat16), w_ref[...],
                        preferred_element_type=jnp.float32)
                + b_ref[...])

    def silu(h):
        # SiLU(x) = x * sigmoid(x).  exp rides the EUP; reciprocal is the
        # EXACT one (approx=True caused the accuracy failure).
        return h * pl.reciprocal(1.0 + jnp.exp(-h))

    h = x_ref[...].astype(jnp.float32)          # x.float()
    h = silu(linear(h, w1_ref, b1_ref))
    h = silu(linear(h, w2_ref, b2_ref))
    h = silu(linear(h, w3_ref, b3_ref))
    h = silu(linear(h, w4_ref, b4_ref))
    o_ref[...] = linear(h, w5_ref, b5_ref)      # final layer, no activation


def _round_up(n, m):
    return ((n + m - 1) // m) * m


@functools.partial(jax.jit, static_argnames=("n_actions", "n_quantiles"))
def qnetwork_forward(x, params, *, n_actions, n_quantiles):
    """Pallas forward. x: (B, D_in). Returns (B, n_actions, n_quantiles)."""
    B, d_in = x.shape
    hidden = params[0][0].shape[1]
    out_dim = n_actions * n_quantiles
    out_pad = _round_up(out_dim, 128)           # lane-dense output width

    # Batch tiling: large tiles amortize the ~0.35us per-grid-step overhead;
    # tiny demo batches just round up to the 8-row sublane granule.
    tile_b = min(512, _round_up(B, 8))
    b_pad = _round_up(B, tile_b)
    if b_pad != B:
        x = jnp.pad(x, ((0, b_pad - B), (0, 0)))

    # Weights -> bf16 (MXU inputs); biases stay f32; pad last layer to 128-lane
    # multiple so the final store is unmasked.
    ws = [w.astype(jnp.bfloat16) for (w, _) in params]
    bs = [b.astype(jnp.float32) for (_, b) in params]
    ws[-1] = jnp.pad(ws[-1], ((0, 0), (0, out_pad - out_dim)))
    bs[-1] = jnp.pad(bs[-1], ((0, 0), (0, out_pad - out_dim)))

    flat_args = [x]
    in_specs = [pl.BlockSpec((tile_b, d_in), lambda i: (i, 0))]
    for w, b in zip(ws, bs):
        flat_args += [w, b]
        # Same block index every grid step -> weights/biases stay VMEM-resident.
        in_specs += [pl.BlockSpec(w.shape, lambda i: (0, 0)),
                     pl.BlockSpec(b.shape, lambda i: (0, 0))]

    flops = 2 * b_pad * (d_in * hidden + 3 * hidden * hidden + hidden * out_pad)
    transcendentals = 4 * b_pad * hidden
    weight_bytes = (2 * (d_in * hidden + 3 * hidden * hidden + hidden * out_pad)
                    + 4 * (4 * hidden + out_pad))
    bytes_accessed = 4 * b_pad * (d_in + out_pad) + weight_bytes

    out = pl.pallas_call(
        _qnet_kernel,
        out_shape=jax.ShapeDtypeStruct((b_pad, out_pad), jnp.float32),
        grid=(b_pad // tile_b,),
        in_specs=in_specs,
        out_specs=pl.BlockSpec((tile_b, out_pad), lambda i: (i, 0)),
        compiler_params=pltpu.CompilerParams(
            dimension_semantics=("parallel",)),
        cost_estimate=pl.CostEstimate(
            flops=flops,
            transcendentals=transcendentals,
            bytes_accessed=bytes_accessed),
    )(*flat_args)

    # Drop batch/lane padding, then nn.Unflatten(1, (n, n_quantiles)).
    return out[:B, :out_dim].reshape(B, n_actions, n_quantiles)


def init_qnetwork_params(key, input_size, hidden, n_actions, n_quantiles):
    """Deterministic init mirroring init_weights():
       weights ~ Normal(0, 1/sqrt(3)/2), biases = 0 (input_size=3 hardcoded
       inside init_weights in the reference)."""
    std = 1.0 / jnp.sqrt(3.0) / 2.0
    dims = [input_size, hidden, hidden, hidden, hidden, n_actions * n_quantiles]
    params = []
    for i in range(5):
        key, sub = jax.random.split(key)
        w = std * jax.random.normal(sub, (dims[i], dims[i + 1]), dtype=jnp.float32)
        b = jnp.zeros((1, dims[i + 1]), dtype=jnp.float32)
        params.append((w, b))
    return params


def qnetwork_forward_ref(x, params):
    """Pure-JAX reference matching the kernel's bf16-matmul / f32-accum numerics
       with the exact sigmoid used inside the kernel."""
    h = x.astype(jnp.float32)
    for i, (w, b) in enumerate(params):
        h = jnp.dot(h.astype(jnp.bfloat16), w.astype(jnp.bfloat16),
                    preferred_element_type=jnp.float32) + b
        if i < len(params) - 1:
            h = h * (1.0 / (1.0 + jnp.exp(-h)))
    return h


if __name__ == "__main__":
    # Small synthetic config consistent with the module:
    # obs dim 8, 4 discrete actions, 50 quantiles, hidden=64, extended_value=True.
    B = 2
    D_IN = 8
    HIDDEN = 64
    N_ACTIONS = 4
    N_QUANTILES = 50

    key = jax.random.PRNGKey(0)
    key, kx = jax.random.split(key)
    x = jax.random.normal(kx, (B, D_IN), dtype=jnp.float32)

    params = init_qnetwork_params(key, D_IN, HIDDEN, N_ACTIONS, N_QUANTILES)

    quantiles = qnetwork_forward(x, params,
                                 n_actions=N_ACTIONS, n_quantiles=N_QUANTILES)
    quantiles = jax.block_until_ready(quantiles)

    # Verify against the pure-JAX reference (same bf16 matmul inputs, same
    # exact sigmoid -> differences are only accumulation-order level).
    ref = qnetwork_forward_ref(x, params).reshape(B, N_ACTIONS, N_QUANTILES)
    assert quantiles.shape == (B, N_ACTIONS, N_QUANTILES)
    assert jnp.allclose(quantiles, ref, atol=1e-2, rtol=1e-2), (
        float(jnp.max(jnp.abs(quantiles - ref))))

    print("KERNEL_OK")
</pallas_src>

<mosaic_0001>
module attributes {stable_mosaic.version = 11 : i64} {
  func.func @_qnet_kernel(%arg0: i32, %arg1: memref<8x8xf32, #tpu.memory_space<vmem>>, %arg2: memref<8x64xbf16, #tpu.memory_space<vmem>>, %arg3: memref<1x64xf32, #tpu.memory_space<vmem>>, %arg4: memref<64x64xbf16, #tpu.memory_space<vmem>>, %arg5: memref<1x64xf32, #tpu.memory_space<vmem>>, %arg6: memref<64x64xbf16, #tpu.memory_space<vmem>>, %arg7: memref<1x64xf32, #tpu.memory_space<vmem>>, %arg8: memref<64x64xbf16, #tpu.memory_space<vmem>>, %arg9: memref<1x64xf32, #tpu.memory_space<vmem>>, %arg10: memref<64x256xbf16, #tpu.memory_space<vmem>>, %arg11: memref<1x256xf32, #tpu.memory_space<vmem>>, %arg12: memref<8x256xf32, #tpu.memory_space<vmem>>) attributes {dimension_semantics = [#tpu.dimension_semantics<parallel>], iteration_bounds = array<i64: 1>, scalar_prefetch = 0 : i64, scratch_operands = 0 : i64, tpu.core_type = #tpu.core_type<tc>, window_params = [{transform_indices = @transform_0, window_bounds = array<i64: 8, 8>}, {pipeline_mode = #tpu.pipeline_mode<synchronous>, transform_indices = @transform_1, window_bounds = array<i64: 8, 64>}, {pipeline_mode = #tpu.pipeline_mode<synchronous>, transform_indices = @transform_2, window_bounds = array<i64: 1, 64>}, {pipeline_mode = #tpu.pipeline_mode<synchronous>, transform_indices = @transform_3, window_bounds = array<i64: 64, 64>}, {pipeline_mode = #tpu.pipeline_mode<synchronous>, transform_indices = @transform_4, window_bounds = array<i64: 1, 64>}, {pipeline_mode = #tpu.pipeline_mode<synchronous>, transform_indices = @transform_5, window_bounds = array<i64: 64, 64>}, {pipeline_mode = #tpu.pipeline_mode<synchronous>, transform_indices = @transform_6, window_bounds = array<i64: 1, 64>}, {pipeline_mode = #tpu.pipeline_mode<synchronous>, transform_indices = @transform_7, window_bounds = array<i64: 64, 64>}, {pipeline_mode = #tpu.pipeline_mode<synchronous>, transform_indices = @transform_8, window_bounds = array<i64: 1, 64>}, {pipeline_mode = #tpu.pipeline_mode<synchronous>, transform_indices = @transform_9, window_bounds = array<i64: 64, 256>}, {pipeline_mode = #tpu.pipeline_mode<synchronous>, transform_indices = @transform_10, window_bounds = array<i64: 1, 256>}, {transform_indices = @transform_11, window_bounds = array<i64: 8, 256>}]} {
    %c0 = arith.constant 0 : index
    %c0_0 = arith.constant 0 : index
    %0 = vector.load %arg1[%c0, %c0_0] : memref<8x8xf32, #tpu.memory_space<vmem>>, vector<8x8xf32>
    %1 = arith.truncf %0 : vector<8x8xf32> to vector<8x8xbf16>
    %c0_1 = arith.constant 0 : index
    %c0_2 = arith.constant 0 : index
    %2 = vector.load %arg2[%c0_1, %c0_2] : memref<8x64xbf16, #tpu.memory_space<vmem>>, vector<8x64xbf16>
    %cst = arith.constant dense<0.000000e+00> : vector<8x64xf32>
    %3 = tpu.matmul %1, %2, %cst {dimension_numbers = #tpu.dot_dimension_numbers<[1], [0], [0], [1], [0, 0, 1, 1], [], []>} : vector<8x8xbf16>, vector<8x64xbf16>, vector<8x64xf32> -> vector<8x64xf32>
    %c0_3 = arith.constant 0 : index
    %c0_4 = arith.constant 0 : index
    %4 = vector.load %arg3[%c0_3, %c0_4] : memref<1x64xf32, #tpu.memory_space<vmem>>, vector<1x64xf32>
    %5 = vector.broadcast %4 : vector<1x64xf32> to vector<8x64xf32>
    %6 = arith.addf %3, %5 : vector<8x64xf32>
    %cst_5 = arith.constant 0.000000e+00 : f32
    %7 = vector.broadcast %cst_5 : f32 to vector<8x64xf32>
    %8 = arith.subf %7, %6 : vector<8x64xf32>
    %9 = math.exp %8 : vector<8x64xf32>
    %cst_6 = arith.constant 1.000000e+00 : f32
    %10 = vector.broadcast %cst_6 : f32 to vector<8x64xf32>
    %11 = arith.addf %10, %9 : vector<8x64xf32>
    %12 = tpu.reciprocal %11 : vector<8x64xf32> -> vector<8x64xf32>
    %13 = arith.mulf %6, %12 : vector<8x64xf32>
    %14 = arith.truncf %13 : vector<8x64xf32> to vector<8x64xbf16>
    %c0_7 = arith.constant 0 : index
    %c0_8 = arith.constant 0 : index
    %15 = vector.load %arg4[%c0_7, %c0_8] : memref<64x64xbf16, #tpu.memory_space<vmem>>, vector<64x64xbf16>
    %cst_9 = arith.constant dense<0.000000e+00> : vector<8x64xf32>
    %16 = tpu.matmul %14, %15, %cst_9 {dimension_numbers = #tpu.dot_dimension_numbers<[1], [0], [0], [1], [0, 0, 1, 1], [], []>} : vector<8x64xbf16>, vector<64x64xbf16>, vector<8x64xf32> -> vector<8x64xf32>
    %c0_10 = arith.constant 0 : index
    %c0_11 = arith.constant 0 : index
    %17 = vector.load %arg5[%c0_10, %c0_11] : memref<1x64xf32, #tpu.memory_space<vmem>>, vector<1x64xf32>
    %18 = vector.broadcast %17 : vector<1x64xf32> to vector<8x64xf32>
    %19 = arith.addf %16, %18 : vector<8x64xf32>
    %cst_12 = arith.constant 0.000000e+00 : f32
    %20 = vector.broadcast %cst_12 : f32 to vector<8x64xf32>
    %21 = arith.subf %20, %19 : vector<8x64xf32>
    %22 = math.exp %21 : vector<8x64xf32>
    %cst_13 = arith.constant 1.000000e+00 : f32
    %23 = vector.broadcast %cst_13 : f32 to vector<8x64xf32>
    %24 = arith.addf %23, %22 : vector<8x64xf32>
    %25 = tpu.reciprocal %24 : vector<8x64xf32> -> vector<8x64xf32>
    %26 = arith.mulf %19, %25 : vector<8x64xf32>
    %27 = arith.truncf %26 : vector<8x64xf32> to vector<8x64xbf16>
    %c0_14 = arith.constant 0 : index
    %c0_15 = arith.constant 0 : index
    %28 = vector.load %arg6[%c0_14, %c0_15] : memref<64x64xbf16, #tpu.memory_space<vmem>>, vector<64x64xbf16>
    %cst_16 = arith.constant dense<0.000000e+00> : vector<8x64xf32>
    %29 = tpu.matmul %27, %28, %cst_16 {dimension_numbers = #tpu.dot_dimension_numbers<[1], [0], [0], [1], [0, 0, 1, 1], [], []>} : vector<8x64xbf16>, vector<64x64xbf16>, vector<8x64xf32> -> vector<8x64xf32>
    %c0_17 = arith.constant 0 : index
    %c0_18 = arith.constant 0 : index
    %30 = vector.load %arg7[%c0_17, %c0_18] : memref<1x64xf32, #tpu.memory_space<vmem>>, vector<1x64xf32>
    %31 = vector.broadcast %30 : vector<1x64xf32> to vector<8x64xf32>
    %32 = arith.addf %29, %31 : vector<8x64xf32>
    %cst_19 = arith.constant 0.000000e+00 : f32
    %33 = vector.broadcast %cst_19 : f32 to vector<8x64xf32>
    %34 = arith.subf %33, %32 : vector<8x64xf32>
    %35 = math.exp %34 : vector<8x64xf32>
    %cst_20 = arith.constant 1.000000e+00 : f32
    %36 = vector.broadcast %cst_20 : f32 to vector<8x64xf32>
    %37 = arith.addf %36, %35 : vector<8x64xf32>
    %38 = tpu.reciprocal %37 : vector<8x64xf32> -> vector<8x64xf32>
    %39 = arith.mulf %32, %38 : vector<8x64xf32>
    %40 = arith.truncf %39 : vector<8x64xf32> to vector<8x64xbf16>
    %c0_21 = arith.constant 0 : index
    %c0_22 = arith.constant 0 : index
    %41 = vector.load %arg8[%c0_21, %c0_22] : memref<64x64xbf16, #tpu.memory_space<vmem>>, vector<64x64xbf16>
    %cst_23 = arith.constant dense<0.000000e+00> : vector<8x64xf32>
    %42 = tpu.matmul %40, %41, %cst_23 {dimension_numbers = #tpu.dot_dimension_numbers<[1], [0], [0], [1], [0, 0, 1, 1], [], []>} : vector<8x64xbf16>, vector<64x64xbf16>, vector<8x64xf32> -> vector<8x64xf32>
    %c0_24 = arith.constant 0 : index
    %c0_25 = arith.constant 0 : index
    %43 = vector.load %arg9[%c0_24, %c0_25] : memref<1x64xf32, #tpu.memory_space<vmem>>, vector<1x64xf32>
    %44 = vector.broadcast %43 : vector<1x64xf32> to vector<8x64xf32>
    %45 = arith.addf %42, %44 : vector<8x64xf32>
    %cst_26 = arith.constant 0.000000e+00 : f32
    %46 = vector.broadcast %cst_26 : f32 to vector<8x64xf32>
    %47 = arith.subf %46, %45 : vector<8x64xf32>
    %48 = math.exp %47 : vector<8x64xf32>
    %cst_27 = arith.constant 1.000000e+00 : f32
    %49 = vector.broadcast %cst_27 : f32 to vector<8x64xf32>
    %50 = arith.addf %49, %48 : vector<8x64xf32>
    %51 = tpu.reciprocal %50 : vector<8x64xf32> -> vector<8x64xf32>
    %52 = arith.mulf %45, %51 : vector<8x64xf32>
    %53 = arith.truncf %52 : vector<8x64xf32> to vector<8x64xbf16>
    %c0_28 = arith.constant 0 : index
    %c0_29 = arith.constant 0 : index
    %54 = vector.load %arg10[%c0_28, %c0_29] : memref<64x256xbf16, #tpu.memory_space<vmem>>, vector<64x256xbf16>
    %cst_30 = arith.constant dense<0.000000e+00> : vector<8x256xf32>
    %55 = tpu.matmul %53, %54, %cst_30 {dimension_numbers = #tpu.dot_dimension_numbers<[1], [0], [0], [1], [0, 0, 1, 1], [], []>} : vector<8x64xbf16>, vector<64x256xbf16>, vector<8x256xf32> -> vector<8x256xf32>
    %c0_31 = arith.constant 0 : index
    %c0_32 = arith.constant 0 : index
    %56 = vector.load %arg11[%c0_31, %c0_32] : memref<1x256xf32, #tpu.memory_space<vmem>>, vector<1x256xf32>
    %57 = vector.broadcast %56 : vector<1x256xf32> to vector<8x256xf32>
    %58 = arith.addf %55, %57 : vector<8x256xf32>
    %c0_33 = arith.constant 0 : index
    %c0_34 = arith.constant 0 : index
    %59 = vector.load %arg12[%c0_33, %c0_34] : memref<8x256xf32, #tpu.memory_space<vmem>>, vector<8x256xf32>
    tpu.vector_store %arg12[%c0_33, %c0_34], %58 {strides = array<i32>} : memref<8x256xf32, #tpu.memory_space<vmem>>, vector<8x256xf32>,
    return
  }
  func.func @transform_0(%arg0: i32) -> (i32, i32) {
    %c0_i32 = arith.constant 0 : i32
    %c0_i32_0 = arith.constant 0 : i32
    return %arg0, %c0_i32 : i32, i32
  }
  func.func @transform_1(%arg0: i32) -> (i32, i32) {
    %c0_i32 = arith.constant 0 : i32
    %c0_i32_0 = arith.constant 0 : i32
    %c0_i32_1 = arith.constant 0 : i32
    return %c0_i32, %c0_i32_0 : i32, i32
  }
  func.func @transform_2(%arg0: i32) -> (i32, i32) {
    %c0_i32 = arith.constant 0 : i32
    %c0_i32_0 = arith.constant 0 : i32
    %c0_i32_1 = arith.constant 0 : i32
    return %c0_i32, %c0_i32_0 : i32, i32
  }
  func.func @transform_3(%arg0: i32) -> (i32, i32) {
    %c0_i32 = arith.constant 0 : i32
    %c0_i32_0 = arith.constant 0 : i32
    %c0_i32_1 = arith.constant 0 : i32
    return %c0_i32, %c0_i32_0 : i32, i32
  }
  func.func @transform_4(%arg0: i32) -> (i32, i32) {
    %c0_i32 = arith.constant 0 : i32
    %c0_i32_0 = arith.constant 0 : i32
    %c0_i32_1 = arith.constant 0 : i32
    return %c0_i32, %c0_i32_0 : i32, i32
  }
  func.func @transform_5(%arg0: i32) -> (i32, i32) {
    %c0_i32 = arith.constant 0 : i32
    %c0_i32_0 = arith.constant 0 : i32
    %c0_i32_1 = arith.constant 0 : i32
    return %c0_i32, %c0_i32_0 : i32, i32
  }
  func.func @transform_6(%arg0: i32) -> (i32, i32) {
    %c0_i32 = arith.constant 0 : i32
    %c0_i32_0 = arith.constant 0 : i32
    %c0_i32_1 = arith.constant 0 : i32
    return %c0_i32, %c0_i32_0 : i32, i32
  }
  func.func @transform_7(%arg0: i32) -> (i32, i32) {
    %c0_i32 = arith.constant 0 : i32
    %c0_i32_0 = arith.constant 0 : i32
    %c0_i32_1 = arith.constant 0 : i32
    return %c0_i32, %c0_i32_0 : i32, i32
  }
  func.func @transform_8(%arg0: i32) -> (i32, i32) {
    %c0_i32 = arith.constant 0 : i32
    %c0_i32_0 = arith.constant 0 : i32
    %c0_i32_1 = arith.constant 0 : i32
    return %c0_i32, %c0_i32_0 : i32, i32
  }
  func.func @transform_9(%arg0: i32) -> (i32, i32) {
    %c0_i32 = arith.constant 0 : i32
    %c0_i32_0 = arith.constant 0 : i32
    %c0_i32_1 = arith.constant 0 : i32
    return %c0_i32, %c0_i32_0 : i32, i32
  }
  func.func @transform_10(%arg0: i32) -> (i32, i32) {
    %c0_i32 = arith.constant 0 : i32
    %c0_i32_0 = arith.constant 0 : i32
    %c0_i32_1 = arith.constant 0 : i32
    return %c0_i32, %c0_i32_0 : i32, i32
  }
  func.func @transform_11(%arg0: i32) -> (i32, i32) {
    %c0_i32 = arith.constant 0 : i32
    %c0_i32_0 = arith.constant 0 : i32
    return %arg0, %c0_i32 : i32, i32
  }
}

</mosaic_0001>

<llo_original>
// kernel: qnetwork_forward.1
$region0: #{qnetwork_forward.1}
  #allocation0 [shape = 'u32[]', space=smem, size = 0x4, offset = 0x4, fixed_abs, tag = 'smem constant byte address 0x4 - core index']
  #allocation1 [shape = 'u32[144,128]{1,0:T(1,128)}', space=vmem, size = 0x12000, scoped, tag = 'internal scratch']
  %s0 = inlined_call_operand.vmem [shape: f32[8,8], index: 0, kind: input, shape index: {}]
  %s1 = inlined_call_operand.vmem [shape: bf16[8,64], index: 1, kind: input, shape index: {}]
  %s2 = inlined_call_operand.vmem [shape: f32[1,64], index: 2, kind: input, shape index: {}]
  %s3 = inlined_call_operand.vmem [shape: bf16[64,64], index: 3, kind: input, shape index: {}]
  %s4 = inlined_call_operand.vmem [shape: f32[1,64], index: 4, kind: input, shape index: {}]
  %s5 = inlined_call_operand.vmem [shape: bf16[64,64], index: 5, kind: input, shape index: {}]
  %s6 = inlined_call_operand.vmem [shape: f32[1,64], index: 6, kind: input, shape index: {}]
  %s7 = inlined_call_operand.vmem [shape: bf16[64,64], index: 7, kind: input, shape index: {}]
  %s8 = inlined_call_operand.vmem [shape: f32[1,64], index: 8, kind: input, shape index: {}]
  %s9 = inlined_call_operand.vmem [shape: bf16[64,256], index: 9, kind: input, shape index: {}]
  %s10 = inlined_call_operand.vmem [shape: f32[1,256], index: 10, kind: input, shape index: {}]
  %s11 = inlined_call_operand.vmem [shape: f32[8,256], index: 11, kind: output, shape index: {}]
  %s12 = sld [smem:[#allocation0]]
  $region54: #{qnetwork_forward.1} parent=0
    _
  %s14 = ssub.s32 1, %s12
  %s15 = scalar_select 0, %s14, %s12
  // Predicated region
  $region2: #{qnetwork_forward.1} parent=0 // pred_check
    _
  $region3: #{qnetwork_forward.1} parent=0 // pred_check_branch
    %17 = sbr.rel (0) target = $region5
  $region4: #{qnetwork_forward.1} parent=0 // pred_region
    _
  $region5: #{qnetwork_forward.1} parent=0 // pred_fallthru
    _
  // Predicated region
  $region6: #{qnetwork_forward.1} parent=0 // pred_check
    _
  $region7: #{qnetwork_forward.1} parent=0 // pred_check_branch
    %19 = sbr.rel (0) target = $region9
  $region8: #{qnetwork_forward.1} parent=0 // pred_region
    _
  $region9: #{qnetwork_forward.1} parent=0 // pred_fallthru
    _
  // Predicated region
  $region10: #{qnetwork_forward.1} parent=0 // pred_check
    _
  $region11: #{qnetwork_forward.1} parent=0 // pred_check_branch
    %21 = sbr.rel (0) target = $region13
  $region12: #{qnetwork_forward.1} parent=0 // pred_region
    _
  $region13: #{qnetwork_forward.1} parent=0 // pred_fallthru
    _
  // Predicated region
  $region14: #{qnetwork_forward.1} parent=0 // pred_check
    _
  $region15: #{qnetwork_forward.1} parent=0 // pred_check_branch
    %23 = sbr.rel (0) target = $region17
  $region16: #{qnetwork_forward.1} parent=0 // pred_region
    _
  $region17: #{qnetwork_forward.1} parent=0 // pred_fallthru
    _
  // Predicated region
  $region18: #{qnetwork_forward.1} parent=0 // pred_check
    _
  $region19: #{qnetwork_forward.1} parent=0 // pred_check_branch
    %25 = sbr.rel (0) target = $region21
  $region20: #{qnetwork_forward.1} parent=0 // pred_region
    _
  $region21: #{qnetwork_forward.1} parent=0 // pred_fallthru
    _
  // Predicated region
  $region22: #{qnetwork_forward.1} parent=0 // pred_check
    _
  $region23: #{qnetwork_forward.1} parent=0 // pred_check_branch
    %27 = sbr.rel (0) target = $region25
  $region24: #{qnetwork_forward.1} parent=0 // pred_region
    _
  $region25: #{qnetwork_forward.1} parent=0 // pred_fallthru
    _
  // Predicated region
  $region26: #{qnetwork_forward.1} parent=0 // pred_check
    _
  $region27: #{qnetwork_forward.1} parent=0 // pred_check_branch
    %29 = sbr.rel (0) target = $region29
  $region28: #{qnetwork_forward.1} parent=0 // pred_region
    _
  $region29: #{qnetwork_forward.1} parent=0 // pred_fallthru
    _
  // Predicated region
  $region30: #{qnetwork_forward.1} parent=0 // pred_check
    _
  $region31: #{qnetwork_forward.1} parent=0 // pred_check_branch
    %31 = sbr.rel (0) target = $region33
  $region32: #{qnetwork_forward.1} parent=0 // pred_region
    _
  $region33: #{qnetwork_forward.1} parent=0 // pred_fallthru
    _
  // Predicated region
  $region34: #{qnetwork_forward.1} parent=0 // pred_check
    _
  $region35: #{qnetwork_forward.1} parent=0 // pred_check_branch
    %33 = sbr.rel (0) target = $region37
  $region36: #{qnetwork_forward.1} parent=0 // pred_region
    _
  $region37: #{qnetwork_forward.1} parent=0 // pred_fallthru
    _
  // Predicated region
  $region38: #{qnetwork_forward.1} parent=0 // pred_check
    _
  $region39: #{qnetwork_forward.1} parent=0 // pred_check_branch
    %35 = sbr.rel (0) target = $region41
  $region40: #{qnetwork_forward.1} parent=0 // pred_region
    _
  $region41: #{qnetwork_forward.1} parent=0 // pred_fallthru
    _
  // Predicated region
  $region42: #{qnetwork_forward.1} parent=0 // pred_check
    _
  $region43: #{qnetwork_forward.1} parent=0 // pred_check_branch
    %37 = sbr.rel (0) target = $region45
  $region44: #{qnetwork_forward.1} parent=0 // pred_region
    _
  $region45: #{qnetwork_forward.1} parent=0 // pred_fallthru
    _
  %v39 = vld [vmem:[%s0] sm:$0xff]
  %v40 = vpack.c.bf16 %v39, %v39
  %v41 = vld [vmem:[%s1] sm:$0xf]
  %v42 = vld [vmem:[%s2] sm:$0x1]
  %v44 = vlaneseq
  %v45 = vshrl.u32 %v44, 7
  %v46 = vsub.s32 0, %v45
  %v47 = vrot.slane %v42, %v46
  %vm49 = vcmask 64512
  %v51 = vsel %vm49, %v40, 0
  %vm53 = vcmask 1043456
  %v55 = vsel %vm53, %v41, 0
  %57 = vmatprep.subr.bf16.mxu0 0
  %58 = vmatpush1.bf16.msra.mxu0 %v55
  %59 = vmatprep.subr.bf16.mxu0 0
  %60 = vmatpush1.bf16.msra.mxu0 0
  %61 = vmatprep.subr.bf16.mxu0 0
  %62 = vmatpush1.bf16.msra.mxu0 0
  %63 = vmatprep.subr.bf16.mxu0 0
  %64 = vmatpush1.bf16.msra.mxu0 0
  %65 = vmatprep.subr.bf16.mxu0 0
  %66 = vmatpush1.bf16.msra.mxu0 0
  %67 = vmatprep.subr.bf16.mxu0 0
  %68 = vmatpush1.bf16.msra.mxu0 0
  %69 = vmatprep.subr.bf16.mxu0 0
  %70 = vmatpush1.bf16.msra.mxu0 0
  %71 = vmatprep.subr.bf16.mxu0 0
  %72 = vmatpush1.bf16.msra.mxu0 0
  %73 = vmatprep.subr.bf16.mxu0 0
  %74 = vmatpush1.bf16.msra.mxu0 0
  %75 = vmatprep.subr.bf16.mxu0 0
  %76 = vmatpush1.bf16.msra.mxu0 0
  %77 = vmatprep.subr.bf16.mxu0 0
  %78 = vmatpush1.bf16.msra.mxu0 0
  %79 = vmatprep.subr.bf16.mxu0 0
  %80 = vmatpush1.bf16.msra.mxu0 0
  %81 = vmatprep.subr.bf16.mxu0 0
  %82 = vmatpush1.bf16.msra.mxu0 0
  %83 = vmatprep.subr.bf16.mxu0 0
  %84 = vmatpush1.bf16.msra.mxu0 0
  %85 = vmatprep.subr.bf16.mxu0 0
  %86 = vmatpush1.bf16.msra.mxu0 0
  %87 = vmatprep.subr.bf16.mxu0 0
  %88 = vmatpush1.bf16.msra.mxu0 0
  %89 = vmatprep.mubr.bf16.mxu0 0
  %90 = vmatmul.mubr.bf16.gmra.mrb[0].mxu0 %v51
  %v91 = vpop.f32.mrb[0].mxu0
  %v92 = vadd.f32 %v47, %v91
  %v93 = vpop.f32.mrb[0].mxu0
  %v94 = vpop.f32.mrb[0].mxu0
  %v95 = vpop.f32.mrb[0].mxu0
  %96 = vdwg.mxu0
  %v97 = vsub.f32 0.0, %v92
  %v98 = vmul.f32 %v97, 1.442695
  %v99 = vpow.pop %v98
  %v100 = vadd.f32 %v99, 1.0
  %v101 = vrcp.pop %v100
  %v102 = vmul.f32 %v92, %v101
  %v103 = vpack.c.bf16 %v102, %v102
  %v104 = vld [vmem:[%s3] sm:$0xf]
  %v105 = vld [vmem:[%s3 + $0x4] sm:$0xf]
  %v106 = vld [vmem:[%s3 + $0x8] sm:$0xf]
  %v107 = vld [vmem:[%s3 + $0xc] sm:$0xf]
  %v108 = vld [vmem:[%s3 + $0x10] sm:$0xf]
  %v109 = vld [vmem:[%s3 + $0x14] sm:$0xf]
  %v110 = vld [vmem:[%s3 + $0x18] sm:$0xf]
  %v111 = vld [vmem:[%s3 + $0x1c] sm:$0xf]
  %v112 = vld [vmem:[%s4] sm:$0x1]
  %v114 = vlaneseq
  %v115 = vshrl.u32 %v114, 7
  %v116 = vsub.s32 0, %v115
  %v117 = vrot.slane %v112, %v116
  %v127 = vunpack.c.l.b16 %v104
  %v128 = vunpack.c.l.b16 %v105
  %v129 = vunpack.c.l.b16 %v106
  %v130 = vunpack.c.l.b16 %v107
  %v131 = vunpack.c.l.b16 %v108
  %v132 = vunpack.c.l.b16 %v109
  %v133 = vunpack.c.l.b16 %v110
  %v134 = vunpack.c.l.b16 %v111
  %v135 = vpack.c.b16 %v128, %v127
  %v136 = vpack.c.b16 %v130, %v129
  %v137 = vpack.c.b16 %v132, %v131
  %v138 = vpack.c.b16 %v134, %v133
  %vm143 = vcmask 523264
  %v145 = vsel %vm143, %v103, 0
  %147 = vmatprep.subr.bf16.mxu0 0
  %148 = vmatpush1.bf16.msra.mxu0 %v135
  %149 = vmatprep.subr.bf16.mxu0 0
  %150 = vmatpush1.bf16.msra.mxu0 %v136
  %151 = vmatprep.subr.bf16.mxu0 0
  %152 = vmatpush1.bf16.msra.mxu0 %v137
  %153 = vmatprep.subr.bf16.mxu0 0
  %154 = vmatpush1.bf16.msra.mxu0 %v138
  %155 = vmatprep.subr.bf16.mxu0 0
  %156 = vmatpush1.bf16.msra.mxu0 0
  %157 = vmatprep.subr.bf16.mxu0 0
  %158 = vmatpush1.bf16.msra.mxu0 0
  %159 = vmatprep.subr.bf16.mxu0 0
  %160 = vmatpush1.bf16.msra.mxu0 0
  %161 = vmatprep.subr.bf16.mxu0 0
  %162 = vmatpush1.bf16.msra.mxu0 0
  %163 = vmatprep.subr.bf16.mxu0 0
  %164 = vmatpush1.bf16.msra.mxu0 0
  %165 = vmatprep.subr.bf16.mxu0 0
  %166 = vmatpush1.bf16.msra.mxu0 0
  %167 = vmatprep.subr.bf16.mxu0 0
  %168 = vmatpush1.bf16.msra.mxu0 0
  %169 = vmatprep.subr.bf16.mxu0 0
  %170 = vmatpush1.bf16.msra.mxu0 0
  %171 = vmatprep.subr.bf16.mxu0 0
  %172 = vmatpush1.bf16.msra.mxu0 0
  %173 = vmatprep.subr.bf16.mxu0 0
  %174 = vmatpush1.bf16.msra.mxu0 0
  %175 = vmatprep.subr.bf16.mxu0 0
  %176 = vmatpush1.bf16.msra.mxu0 0
  %177 = vmatprep.subr.bf16.mxu0 0
  %178 = vmatpush1.bf16.msra.mxu0 0
  %179 = vmatprep.mubr.bf16.mxu0 0
  %180 = vmatmul.mubr.bf16.gmra.mrb[0].mxu0 %v145
  %v181 = vpop.f32.mrb[0].mxu0
  %v182 = vadd.f32 %v117, %v181
  %v183 = vpop.f32.mrb[0].mxu0
  %v184 = vpop.f32.mrb[0].mxu0
  %v185 = vpop.f32.mrb[0].mxu0
  %186 = vdwg.mxu0
  %v187 = vsub.f32 0.0, %v182
  %v188 = vmul.f32 %v187, 1.442695
  %v189 = vpow.pop %v188
  %v190 = vadd.f32 %v189, 1.0
  %v191 = vrcp.pop %v190
  %v192 = vmul.f32 %v182, %v191
  %v193 = vpack.c.bf16 %v192, %v192
  %v194 = vld [vmem:[%s5] sm:$0xf]
  %v195 = vld [vmem:[%s5 + $0x4] sm:$0xf]
  %v196 = vld [vmem:[%s5 + $0x8] sm:$0xf]
  %v197 = vld [vmem:[%s5 + $0xc] sm:$0xf]
  %v198 = vld [vmem:[%s5 + $0x10] sm:$0xf]
  %v199 = vld [vmem:[%s5 + $0x14] sm:$0xf]
  %v200 = vld [vmem:[%s5 + $0x18] sm:$0xf]
  %v201 = vld [vmem:[%s5 + $0x1c] sm:$0xf]
  %v202 = vld [vmem:[%s6] sm:$0x1]
  %v204 = vlaneseq
  %v205 = vshrl.u32 %v204, 7
  %v206 = vsub.s32 0, %v205
  %v207 = vrot.slane %v202, %v206
  %v217 = vunpack.c.l.b16 %v194
  %v218 = vunpack.c.l.b16 %v195
  %v219 = vunpack.c.l.b16 %v196
  %v220 = vunpack.c.l.b16 %v197
  %v221 = vunpack.c.l.b16 %v198
  %v222 = vunpack.c.l.b16 %v199
  %v223 = vunpack.c.l.b16 %v200
  %v224 = vunpack.c.l.b16 %v201
  %v225 = vpack.c.b16 %v218, %v217
  %v226 = vpack.c.b16 %v220, %v219
  %v227 = vpack.c.b16 %v222, %v221
  %v228 = vpack.c.b16 %v224, %v223
  %v234 = vsel %vm143, %v193, 0
  %236 = vmatprep.subr.bf16.mxu0 0
  %237 = vmatpush1.bf16.msra.mxu0 %v225
  %238 = vmatprep.subr.bf16.mxu0 0
  %239 = vmatpush1.bf16.msra.mxu0 %v226
  %240 = vmatprep.subr.bf16.mxu0 0
  %241 = vmatpush1.bf16.msra.mxu0 %v227
  %242 = vmatprep.subr.bf16.mxu0 0
  %243 = vmatpush1.bf16.msra.mxu0 %v228
  %244 = vmatprep.subr.bf16.mxu0 0
  %245 = vmatpush1.bf16.msra.mxu0 0
  %246 = vmatprep.subr.bf16.mxu0 0
  %247 = vmatpush1.bf16.msra.mxu0 0
  %248 = vmatprep.subr.bf16.mxu0 0
  %249 = vmatpush1.bf16.msra.mxu0 0
  %250 = vmatprep.subr.bf16.mxu0 0
  %251 = vmatpush1.bf16.msra.mxu0 0
  %252 = vmatprep.subr.bf16.mxu0 0
  %253 = vmatpush1.bf16.msra.mxu0 0
  %254 = vmatprep.subr.bf16.mxu0 0
  %255 = vmatpush1.bf16.msra.mxu0 0
  %256 = vmatprep.subr.bf16.mxu0 0
  %257 = vmatpush1.bf16.msra.mxu0 0
  %258 = vmatprep.subr.bf16.mxu0 0
  %259 = vmatpush1.bf16.msra.mxu0 0
  %260 = vmatprep.subr.bf16.mxu0 0
  %261 = vmatpush1.bf16.msra.mxu0 0
  %262 = vmatprep.subr.bf16.mxu0 0
  %263 = vmatpush1.bf16.msra.mxu0 0
  %264 = vmatprep.subr.bf16.mxu0 0
  %265 = vmatpush1.bf16.msra.mxu0 0
  %266 = vmatprep.subr.bf16.mxu0 0
  %267 = vmatpush1.bf16.msra.mxu0 0
  %268 = vmatprep.mubr.bf16.mxu0 0
  %269 = vmatmul.mubr.bf16.gmra.mrb[0].mxu0 %v234
  %v270 = vpop.f32.mrb[0].mxu0
  %v271 = vadd.f32 %v207, %v270
  %v272 = vpop.f32.mrb[0].mxu0
  %v273 = vpop.f32.mrb[0].mxu0
  %v274 = vpop.f32.mrb[0].mxu0
  %275 = vdwg.mxu0
  %v276 = vsub.f32 0.0, %v271
  %v277 = vmul.f32 %v276, 1.442695
  %v278 = vpow.pop %v277
  %v279 = vadd.f32 %v278, 1.0
  %v280 = vrcp.pop %v279
  %v281 = vmul.f32 %v271, %v280
  %v282 = vpack.c.bf16 %v281, %v281
  %v283 = vld [vmem:[%s7] sm:$0xf]
  %v284 = vld [vmem:[%s7 + $0x4] sm:$0xf]
  %v285 = vld [vmem:[%s7 + $0x8] sm:$0xf]
  %v286 = vld [vmem:[%s7 + $0xc] sm:$0xf]
  %v287 = vld [vmem:[%s7 + $0x10] sm:$0xf]
  %v288 = vld [vmem:[%s7 + $0x14] sm:$0xf]
  %v289 = vld [vmem:[%s7 + $0x18] sm:$0xf]
  %v290 = vld [vmem:[%s7 + $0x1c] sm:$0xf]
  %v291 = vld [vmem:[%s8] sm:$0x1]
  %v293 = vlaneseq
  %v294 = vshrl.u32 %v293, 7
  %v295 = vsub.s32 0, %v294
  %v296 = vrot.slane %v291, %v295
  %v306 = vunpack.c.l.b16 %v283
  %v307 = vunpack.c.l.b16 %v284
  %v308 = vunpack.c.l.b16 %v285
  %v309 = vunpack.c.l.b16 %v286
  %v310 = vunpack.c.l.b16 %v287
  %v311 = vunpack.c.l.b16 %v288
  %v312 = vunpack.c.l.b16 %v289
  %v313 = vunpack.c.l.b16 %v290
  %v314 = vpack.c.b16 %v307, %v306
  %v315 = vpack.c.b16 %v309, %v308
  %v316 = vpack.c.b16 %v311, %v310
  %v317 = vpack.c.b16 %v313, %v312
  %v323 = vsel %vm143, %v282, 0
  %325 = vmatprep.subr.bf16.mxu0 0
  %326 = vmatpush1.bf16.msra.mxu0 %v314
  %327 = vmatprep.subr.bf16.mxu0 0
  %328 = vmatpush1.bf16.msra.mxu0 %v315
  %329 = vmatprep.subr.bf16.mxu0 0
  %330 = vmatpush1.bf16.msra.mxu0 %v316
  %331 = vmatprep.subr.bf16.mxu0 0
  %332 = vmatpush1.bf16.msra.mxu0 %v317
  %333 = vmatprep.subr.bf16.mxu0 0
  %334 = vmatpush1.bf16.msra.mxu0 0
  %335 = vmatprep.subr.bf16.mxu0 0
  %336 = vmatpush1.bf16.msra.mxu0 0
  %337 = vmatprep.subr.bf16.mxu0 0
  %338 = vmatpush1.bf16.msra.mxu0 0
  %339 = vmatprep.subr.bf16.mxu0 0
  %340 = vmatpush1.bf16.msra.mxu0 0
  %341 = vmatprep.subr.bf16.mxu0 0
  %342 = vmatpush1.bf16.msra.mxu0 0
  %343 = vmatprep.subr.bf16.mxu0 0
  %344 = vmatpush1.bf16.msra.mxu0 0
  %345 = vmatprep.subr.bf16.mxu0 0
  %346 = vmatpush1.bf16.msra.mxu0 0
  %347 = vmatprep.subr.bf16.mxu0 0
  %348 = vmatpush1.bf16.msra.mxu0 0
  %349 = vmatprep.subr.bf16.mxu0 0
  %350 = vmatpush1.bf16.msra.mxu0 0
  %351 = vmatprep.subr.bf16.mxu0 0
  %352 = vmatpush1.bf16.msra.mxu0 0
  %353 = vmatprep.subr.bf16.mxu0 0
  %354 = vmatpush1.bf16.msra.mxu0 0
  %355 = vmatprep.subr.bf16.mxu0 0
  %356 = vmatpush1.bf16.msra.mxu0 0
  %357 = vmatprep.mubr.bf16.mxu0 0
  %358 = vmatmul.mubr.bf16.gmra.mrb[0].mxu0 %v323
  %v359 = vpop.f32.mrb[0].mxu0
  %v360 = vadd.f32 %v296, %v359
  %v361 = vpop.f32.mrb[0].mxu0
  %v362 = vpop.f32.mrb[0].mxu0
  %v363 = vpop.f32.mrb[0].mxu0
  %364 = vdwg.mxu0
  %v365 = vsub.f32 0.0, %v360
  %v366 = vmul.f32 %v365, 1.442695
  %v367 = vpow.pop %v366
  %v368 = vadd.f32 %v367, 1.0
  %v369 = vrcp.pop %v368
  %v370 = vmul.f32 %v360, %v369
  %v371 = vpack.c.bf16 %v370, %v370
  %v372 = vld [vmem:[%s9] sm:$0xff]
  %v373 = vld [vmem:[%s9 + $0x8] sm:$0xff]
  %v374 = vld [vmem:[%s9 + $0x10] sm:$0xff]
  %v375 = vld [vmem:[%s9 + $0x18] sm:$0xff]
  %v376 = vld [vmem:[%s9 + $0x20] sm:$0xff]
  %v377 = vld [vmem:[%s9 + $0x28] sm:$0xff]
  %v378 = vld [vmem:[%s9 + $0x30] sm:$0xff]
  %v379 = vld [vmem:[%s9 + $0x38] sm:$0xff]
  %v380 = vld [vmem:[%s10] sm:$0x3]
  %v382 = vlaneseq
  %v383 = vshrl.u32 %v382, 7
  %v384 = vsub.s32 0, %v383
  %v385 = vrot.slane %v380, %v384
  %v386 = vlaneseq
  %v387 = vshrl.u32 %v386, 7
  %v388 = vsub.s32 1, %v387
  %v389 = vrot.slane %v380, %v388
  %v400 = vunpack.c.l.b16 %v372
  %v401 = vunpack.c.h.b16 %v372
  %v402 = vunpack.c.l.b16 %v373
  %v403 = vunpack.c.h.b16 %v373
  %v404 = vunpack.c.l.b16 %v374
  %v405 = vunpack.c.h.b16 %v374
  %v406 = vunpack.c.l.b16 %v375
  %v407 = vunpack.c.h.b16 %v375
  %v408 = vunpack.c.l.b16 %v376
  %v409 = vunpack.c.h.b16 %v376
  %v410 = vunpack.c.l.b16 %v377
  %v411 = vunpack.c.h.b16 %v377
  %v412 = vunpack.c.l.b16 %v378
  %v413 = vunpack.c.h.b16 %v378
  %v414 = vunpack.c.l.b16 %v379
  %v415 = vunpack.c.h.b16 %v379
  %v416 = vpack.c.b16 %v402, %v400
  %v417 = vpack.c.b16 %v403, %v401
  %v418 = vpack.c.b16 %v406, %v404
  %v419 = vpack.c.b16 %v407, %v405
  %v420 = vpack.c.b16 %v410, %v408
  %v421 = vpack.c.b16 %v411, %v409
  %v422 = vpack.c.b16 %v414, %v412
  %v423 = vpack.c.b16 %v415, %v413
  %v433 = vsel %vm143, %v371, 0
  %435 = vmatprep.subr.bf16.mxu0 %v417
  %436 = vmatpush1.bf16.msra.mxu0 %v416
  %437 = vmatprep.subr.bf16.mxu0 %v419
  %438 = vmatpush1.bf16.msra.mxu0 %v418
  %439 = vmatprep.subr.bf16.mxu0 %v421
  %440 = vmatpush1.bf16.msra.mxu0 %v420
  %441 = vmatprep.subr.bf16.mxu0 %v423
  %442 = vmatpush1.bf16.msra.mxu0 %v422
  %443 = vmatprep.subr.bf16.mxu0 0
  %444 = vmatpush1.bf16.msra.mxu0 0
  %445 = vmatprep.subr.bf16.mxu0 0
  %446 = vmatpush1.bf16.msra.mxu0 0
  %447 = vmatprep.subr.bf16.mxu0 0
  %448 = vmatpush1.bf16.msra.mxu0 0
  %449 = vmatprep.subr.bf16.mxu0 0
  %450 = vmatpush1.bf16.msra.mxu0 0
  %451 = vmatprep.subr.bf16.mxu0 0
  %452 = vmatpush1.bf16.msra.mxu0 0
  %453 = vmatprep.subr.bf16.mxu0 0
  %454 = vmatpush1.bf16.msra.mxu0 0
  %455 = vmatprep.subr.bf16.mxu0 0
  %456 = vmatpush1.bf16.msra.mxu0 0
  %457 = vmatprep.subr.bf16.mxu0 0
  %458 = vmatpush1.bf16.msra.mxu0 0
  %459 = vmatprep.subr.bf16.mxu0 0
  %460 = vmatpush1.bf16.msra.mxu0 0
  %461 = vmatprep.subr.bf16.mxu0 0
  %462 = vmatpush1.bf16.msra.mxu0 0
  %463 = vmatprep.subr.bf16.mxu0 0
  %464 = vmatpush1.bf16.msra.mxu0 0
  %465 = vmatprep.subr.bf16.mxu0 0
  %466 = vmatpush1.bf16.msra.mxu0 0
  %467 = vmatprep.mubr.bf16.mxu0 0
  %468 = vmatmul.mubr.bf16.gmra.mrb[0].mxu0 %v433
  %v469 = vpop.f32.mrb[0].mxu0
  %v470 = vadd.f32 %v385, %v469
  %v471 = vpop.f32.mrb[0].mxu0
  %v472 = vadd.f32 %v389, %v471
  %v473 = vpop.f32.mrb[0].mxu0
  %v474 = vpop.f32.mrb[0].mxu0
  %475 = vdwg.mxu0
  %476 = vst [vmem:[%s11] sm:$0xff] %v470
  %477 = vst [vmem:[%s11 + $0x8] sm:$0xff] %v472
  // Predicated region
  $region46: #{qnetwork_forward.1} parent=0 // pred_check
    _
  $region47: #{qnetwork_forward.1} parent=0 // pred_check_branch
    %479 = sbr.rel (0) target = $region49
  $region48: #{qnetwork_forward.1} parent=0 // pred_region
    _
  $region49: #{qnetwork_forward.1} parent=0 // pred_fallthru
    _
  // Predicated region
  $region50: #{qnetwork_forward.1} parent=0 // pred_check
    _
  $region51: #{qnetwork_forward.1} parent=0 // pred_check_branch
    %481 = sbr.rel (0) target = $region53
  $region52: #{qnetwork_forward.1} parent=0 // pred_region
    _
  $region53: #{qnetwork_forward.1} parent=0 // pred_fallthru
    _

</llo_original>
